<compile_context>
chip_gen: v7x
topology: tpu7x:2x2x1
jax: 0.10.0
libtpu: 0.0.40
codegen_flags: <defaults>
</compile_context>

<pallas_src>
import warnings

import jax
import jax.numpy as jnp
from jax.experimental import pallas as pl
from jax.experimental.pallas import tpu as pltpu


# Scoped-VMEM limit for the tiled init kernels.  32 MiB is within every
# generation's physical VMEM (v5e/v6e: 128 MiB, v7x: 64 MiB/TC) and above
# v5e's 16 MiB default scoped limit.
_VMEM_LIMIT_BYTES = 32 * 1024 * 1024


def _pick_row_tile(n, d, itemsize=4, budget_bytes=2 << 20, row_align=8,
                   min_blocks=4):
    """Row tile such that one (t, d) block stays ~budget_bytes (2 arrays x 2
    pipeline buffers stay well under every generation's scoped VMEM), the grid
    has >= min_blocks steps when possible (pipelining + v7x megacore), and t
    is a multiple of row_align (8 for row blocks, 128 when the tile becomes
    the lane dim of a transposed output block)."""
    if n <= row_align:
        return n
    rows_budget = max(row_align, budget_bytes // max(1, d * itemsize))
    rows_par = max(row_align, n // min_blocks)
    t = min(n, rows_budget, rows_par)
    t = max(row_align, (t // row_align) * row_align)
    return min(t, n)


def _init_compiler_params():
    return pltpu.CompilerParams(
        dimension_semantics=("parallel",),
        vmem_limit_bytes=_VMEM_LIMIT_BYTES,
    )


# ---------------------------------------------------------------------------
# Kernel 1: row-wise L2 normalization (bank init, torch F.normalize).
# ---------------------------------------------------------------------------
def _normalize_kernel(x_ref, o_ref):
    x = x_ref[...].astype(jnp.float32)
    ssq = jnp.sum(x * x, axis=-1, keepdims=True)
    o_ref[...] = x * jax.lax.rsqrt(jnp.maximum(ssq, 1e-24))


def _row_normalize(x):
    n, d = x.shape
    t = _pick_row_tile(n, d, row_align=8)
    return pl.pallas_call(
        _normalize_kernel,
        out_shape=jax.ShapeDtypeStruct((n, d), jnp.float32),
        grid=(pl.cdiv(n, t),),
        in_specs=[pl.BlockSpec((t, d), lambda i: (i, 0))],
        out_specs=pl.BlockSpec((t, d), lambda i: (i, 0)),
        compiler_params=_init_compiler_params(),
    )(x)


# ---------------------------------------------------------------------------
# Kernel 2: tiled transpose (one-time init of the (dim, n) view).
# ---------------------------------------------------------------------------
def _transpose_kernel(x_ref, o_ref):
    o_ref[...] = x_ref[...].T


def _transpose_bank(bank):
    n, d = bank.shape
    # t becomes the lane dim of the output block -> 128-align it.
    t = _pick_row_tile(n, d, row_align=128)
    return pl.pallas_call(
        _transpose_kernel,
        out_shape=jax.ShapeDtypeStruct((d, n), bank.dtype),
        grid=(pl.cdiv(n, t),),
        in_specs=[pl.BlockSpec((t, d), lambda i: (i, 0))],
        out_specs=pl.BlockSpec((d, t), lambda i: (0, i)),
        compiler_params=_init_compiler_params(),
    )(bank)


# ---------------------------------------------------------------------------
# Kernel 3: tiled row copy (one-time init of the (n, dim) view).
# ---------------------------------------------------------------------------
def _copy_kernel(x_ref, o_ref):
    o_ref[...] = x_ref[...]


def _copy_rows(x):
    n, d = x.shape
    t = _pick_row_tile(n, d, row_align=8)
    return pl.pallas_call(
        _copy_kernel,
        out_shape=jax.ShapeDtypeStruct((n, d), x.dtype),
        grid=(pl.cdiv(n, t),),
        in_specs=[pl.BlockSpec((t, d), lambda i: (i, 0))],
        out_specs=pl.BlockSpec((t, d), lambda i: (i, 0)),
        compiler_params=_init_compiler_params(),
    )(x)


# ---------------------------------------------------------------------------
# Kernel 4: ring-buffer ROW update, in place.
#   bank[ptr + i] = batch[i]  for ptr + i < n
#   new_ptr = 0 if ptr + b >= n else ptr + b
# Bank and batch both stay in HBM; rows are copied HBM->HBM.
# ---------------------------------------------------------------------------
def _row_update_kernel(ptr_ref, batch_ref, bank_in_ref, bank_out_ref,
                       new_ptr_ref, sem):
    del bank_in_ref  # aliased with bank_out_ref
    n = bank_out_ref.shape[0]
    b = batch_ref.shape[0]
    ptr = ptr_ref[0]

    # Scalar epilogue first: independent of the DMAs, and storing it before
    # any wait keeps the SMEM store off the DMA critical path.
    new_ptr_ref[0] = jnp.where(ptr + b >= n, 0, ptr + b).astype(jnp.int32)

    @pl.when(ptr + b <= n)
    def _():
        cp = pltpu.make_async_copy(batch_ref, bank_out_ref.at[pl.ds(ptr, b)],
                                   sem)
        cp.start()
        cp.wait()

    @pl.when(ptr + b > n)
    def _():
        # Rare wrap-around tail: bank[ptr:] = batch[: n - ptr].
        rows = n - ptr

        def start(i, c):
            pltpu.make_async_copy(batch_ref.at[pl.ds(i, 1)],
                                  bank_out_ref.at[pl.ds(ptr + i, 1)],
                                  sem).start()
            return c

        jax.lax.fori_loop(0, rows, start, 0)  # start all DMAs first

        def wait(i, c):
            pltpu.make_async_copy(batch_ref.at[pl.ds(0, 1)],
                                  bank_out_ref.at[pl.ds(0, 1)],
                                  sem).wait()
            return c

        jax.lax.fori_loop(0, rows, wait, 0)   # then wait for all of them


def _row_update_impl(bank, ptr, batch):
    n, d = bank.shape
    batch = batch.astype(bank.dtype)
    return pl.pallas_call(
        _row_update_kernel,
        out_shape=(
            jax.ShapeDtypeStruct((n, d), bank.dtype),
            jax.ShapeDtypeStruct((1,), jnp.int32),
        ),
        in_specs=[
            pl.BlockSpec(memory_space=pltpu.SMEM),  # ptr
            pl.BlockSpec(memory_space=pl.ANY),      # batch (HBM -> HBM copy)
            pl.BlockSpec(memory_space=pl.ANY),      # bank stays in HBM
        ],
        out_specs=(
            pl.BlockSpec(memory_space=pl.ANY),      # aliased with bank input
            pl.BlockSpec(memory_space=pltpu.SMEM),  # new ptr
        ),
        scratch_shapes=[pltpu.SemaphoreType.DMA(())],
        input_output_aliases={2: 0},
    )(ptr, batch, bank)


# Always donate: the buffers passed here are owned by the module (either the
# never-handed-out canonical bank or a view buffer from a previous forward).
_row_update = jax.jit(_row_update_impl, donate_argnums=(0,))


# ---------------------------------------------------------------------------
# Kernel 5: ring-buffer COLUMN-slab update of the (dim, n) transposed view.
#   view[:, ptr + j] = batch[j, :]  for ptr + j < n
# The batch is transposed in VMEM (XLU) and the (d, b) slab is written with a
# single strided DMA into the HBM-resident view.
# ---------------------------------------------------------------------------
def _col_update_kernel(ptr_ref, batch_ref, view_in_ref, view_out_ref,
                       bt_ref, sem):
    del view_in_ref  # aliased with view_out_ref
    _, n = view_out_ref.shape
    b = batch_ref.shape[0]
    ptr = ptr_ref[0]

    bt_ref[...] = batch_ref[...].T  # (b, d) -> (d, b) in VMEM

    @pl.when(ptr + b <= n)
    def _():
        cp = pltpu.make_async_copy(bt_ref, view_out_ref.at[:, pl.ds(ptr, b)],
                                   sem)
        cp.start()
        cp.wait()

    @pl.when(ptr + b > n)
    def _():
        # Rare wrap-around tail: view[:, ptr:] = batch[: n - ptr].T
        # Statically unrolled over the (small) batch size; out-of-range
        # columns are skipped.  All DMAs are started before any wait.
        cols = n - ptr
        for j in range(b):
            @pl.when(j < cols)
            def _start(j=j):
                pltpu.make_async_copy(
                    bt_ref.at[:, pl.ds(j, 1)],
                    view_out_ref.at[:, pl.ds(ptr + j, 1)],
                    sem).start()
        for j in range(b):
            @pl.when(j < cols)
            def _wait(j=j):
                pltpu.make_async_copy(
                    bt_ref.at[:, pl.ds(0, 1)],
                    view_out_ref.at[:, pl.ds(0, 1)],
                    sem).wait()


def _col_update_impl(view, ptr, batch):
    d, n = view.shape
    b = batch.shape[0]
    batch = batch.astype(view.dtype)
    return pl.pallas_call(
        _col_update_kernel,
        out_shape=jax.ShapeDtypeStruct((d, n), view.dtype),
        in_specs=[
            pl.BlockSpec(memory_space=pltpu.SMEM),  # ptr
            pl.BlockSpec(memory_space=pltpu.VMEM),  # batch (b x d, tiny)
            pl.BlockSpec(memory_space=pl.ANY),      # view stays in HBM
        ],
        out_specs=pl.BlockSpec(memory_space=pl.ANY),  # aliased with view input
        scratch_shapes=[
            pltpu.VMEM((d, b), view.dtype),           # transposed batch
            pltpu.SemaphoreType.DMA(()),
        ],
        input_output_aliases={2: 0},
    )(ptr, batch, view)


_col_update = jax.jit(_col_update_impl, donate_argnums=(0,))


# ---------------------------------------------------------------------------
# JAX-side module mirroring lightly's MemoryBankModule.
# ---------------------------------------------------------------------------
class MemoryBankModule:
    def __init__(self, size=65536, gather_distributed=False,
                 feature_dim_first=True, key=None):
        size_tuple = (size,) if isinstance(size, int) else tuple(size)
        if any(x < 0 for x in size_tuple):
            raise ValueError(
                f"Illegal memory bank size {size}, all entries must be "
                "non-negative.")
        self.size = size_tuple
        self.gather_distributed = gather_distributed
        self.feature_dim_first = feature_dim_first
        self._key = key if key is not None else jax.random.PRNGKey(0)

        self.bank = None                      # canonical (n, dim), eagerly updated
        self._view = None                     # caller-facing buffer, lazily synced
        self._pending = None                  # (old_ptr, batch) not yet in _view
        self.bank_ptr = jnp.zeros((1,), jnp.int32)

        if isinstance(size, int) and size > 0:
            warnings.warn(
                f"Memory bank size 'size={size}' does not specify feature "
                "dimension. It is recommended to set the feature dimension "
                "with 'size=(n, dim)'.", UserWarning)
        elif len(size_tuple) > 1 and size_tuple[0] > 0:
            self._init_memory_bank(size_tuple)

    def _init_memory_bank(self, size):
        raw = jax.random.normal(self._key, size, dtype=jnp.float32)
        self.bank = _row_normalize(raw)           # Pallas tiled L2-normalize
        if self.feature_dim_first:
            self._view = _transpose_bank(self.bank)   # one-time full transpose
        else:
            self._view = _copy_rows(self.bank)        # one-time full copy
        self._pending = None
        self.bank_ptr = jnp.zeros((1,), jnp.int32)

    def _sync_view(self):
        """Apply the queued ring update to the caller-facing view: O(b*d)."""
        if self._pending is None:
            return
        ptr, batch = self._pending
        if self.feature_dim_first:
            self._view = _col_update(self._view, ptr, batch)
        else:
            self._view, _ = _row_update(self._view, ptr, batch)
        self._pending = None

    def _dequeue_and_enqueue(self, batch):
        if self.gather_distributed:
            # TODO(synk): concat_all_gather (cross-device all-gather) not
            # implemented; single-device semantics only.
            pass
        old_ptr = self.bank_ptr
        # Eager, in-place (donated) canonical-bank update: O(b*d) HBM traffic.
        self.bank, self.bank_ptr = _row_update(self.bank, old_ptr, batch)
        # The caller-facing view is synced lazily on the next forward.
        self._pending = (old_ptr, batch)

    def __call__(self, output, labels=None, update=False):
        if self.size[0] == 0:
            return output, None
        if self.bank is None:
            self._init_memory_bank((*self.size, *output.shape[1:]))
        # Bring the view up to date with all *previous* updates, then hand it
        # out.  NOTE: this reuses (donates) the buffer returned by the
        # previous forward call — standard JAX donation contract.
        self._sync_view()
        bank = self._view
        if update:
            self._dequeue_and_enqueue(output)
        return output, bank


# ---------------------------------------------------------------------------
if __name__ == "__main__":
    key = jax.random.PRNGKey(0)
    k_bank, k_out = jax.random.split(key)

    N, D, B = 64, 128, 8
    module = MemoryBankModule(size=(N, D), feature_dim_first=True, key=k_bank)
    output = jax.random.normal(k_out, (B, D), dtype=jnp.float32)

    # --- feature_dim_first=True path -------------------------------------
    out, bank = module(output, update=True)
    jax.block_until_ready((out, bank, module.bank, module.bank_ptr))
    assert out.shape == (B, D)
    assert bank.shape == (D, N)
    # returned bank is the pre-update snapshot -> entries are unit-norm
    assert jnp.allclose(jnp.linalg.norm(bank, axis=0), 1.0, atol=1e-4)
    # canonical bank is eagerly updated in place
    assert jnp.array_equal(module.bank[:B], output)
    assert int(module.bank_ptr[0]) == B

    # cycle through the whole bank to exercise pointer wrap-around
    for _ in range(N // B - 1):
        module(output, update=True)
    jax.block_until_ready(module.bank_ptr)
    assert int(module.bank_ptr[0]) == 0

    # one more forward (no update): view must now equal the full bank, transposed
    _, bank_final = module(output, update=False)
    jax.block_until_ready(bank_final)
    assert jnp.array_equal(bank_final.T, module.bank)

    # --- feature_dim_first=False path -------------------------------------
    module2 = MemoryBankModule(size=(N, D), feature_dim_first=False, key=k_bank)
    _, bank2 = module2(output, update=True)
    jax.block_until_ready((bank2, module2.bank, module2.bank_ptr))
    assert bank2.shape == (N, D)
    # pre-update snapshot: first B rows still unit-norm
    assert jnp.allclose(jnp.linalg.norm(bank2[:B], axis=-1), 1.0, atol=1e-4)
    assert jnp.array_equal(module2.bank[:B], output)
    assert int(module2.bank_ptr[0]) == B

    _, bank2b = module2(output, update=True)   # incremental row-view sync
    jax.block_until_ready(bank2b)
    assert jnp.array_equal(bank2b[:B], output)
    assert int(module2.bank_ptr[0]) == 2 * B

    # --- wrap-around tail path (n not a multiple of batch size) -----------
    N3 = 20
    module3 = MemoryBankModule(size=(N3, D), feature_dim_first=True, key=k_bank)
    for _ in range(3):                         # 3rd update wraps (16 + 8 > 20)
        module3(output, update=True)
    _, bank3 = module3(output, update=False)   # syncs the wrapping column slab
    jax.block_until_ready((bank3, module3.bank, module3.bank_ptr))
    assert int(module3.bank_ptr[0]) == 0
    assert jnp.array_equal(module3.bank[16:], output[: N3 - 16])
    assert jnp.array_equal(bank3.T, module3.bank)

    print("KERNEL_OK")
</pallas_src>

<mosaic_0001>
module attributes {stable_mosaic.version = 11 : i64} {
  func.func @_normalize_kernel(%arg0: i32, %arg1: memref<16x128xf32, #tpu.memory_space<vmem>>, %arg2: memref<16x128xf32, #tpu.memory_space<vmem>>) attributes {dimension_semantics = [#tpu.dimension_semantics<parallel>], iteration_bounds = array<i64: 4>, scalar_prefetch = 0 : i64, scratch_operands = 0 : i64, tpu.core_type = #tpu.core_type<tc>, window_params = [{transform_indices = @transform_0, window_bounds = array<i64: 16, 128>}, {transform_indices = @transform_1, window_bounds = array<i64: 16, 128>}]} {
    %c0 = arith.constant 0 : index
    %c0_0 = arith.constant 0 : index
    %0 = vector.load %arg1[%c0, %c0_0] : memref<16x128xf32, #tpu.memory_space<vmem>>, vector<16x128xf32>
    %1 = arith.mulf %0, %0 : vector<16x128xf32>
    %cst = arith.constant dense<0.000000e+00> : vector<16xf32>
    %2 = vector.multi_reduction <add>, %1, %cst [1] : vector<16x128xf32> to vector<16xf32>
    %3 = vector.shape_cast %2 : vector<16xf32> to vector<16x1xf32>
    %cst_1 = arith.constant 1.000000e-24 : f32
    %4 = vector.broadcast %cst_1 : f32 to vector<16x1xf32>
    %5 = arith.maximumf %3, %4 : vector<16x1xf32>
    %6 = math.rsqrt %5 : vector<16x1xf32>
    %7 = vector.broadcast %6 : vector<16x1xf32> to vector<16x128xf32>
    %8 = arith.mulf %0, %7 : vector<16x128xf32>
    %c0_2 = arith.constant 0 : index
    %c0_3 = arith.constant 0 : index
    %9 = vector.load %arg2[%c0_2, %c0_3] : memref<16x128xf32, #tpu.memory_space<vmem>>, vector<16x128xf32>
    tpu.vector_store %arg2[%c0_2, %c0_3], %8 {strides = array<i32>} : memref<16x128xf32, #tpu.memory_space<vmem>>, vector<16x128xf32>,
    return
  }
  func.func @transform_0(%arg0: i32) -> (i32, i32) {
    %c0_i32 = arith.constant 0 : i32
    %c0_i32_0 = arith.constant 0 : i32
    return %arg0, %c0_i32 : i32, i32
  }
  func.func @transform_1(%arg0: i32) -> (i32, i32) {
    %c0_i32 = arith.constant 0 : i32
    %c0_i32_0 = arith.constant 0 : i32
    return %arg0, %c0_i32 : i32, i32
  }
}

</mosaic_0001>

<llo_original>
// kernel: tpu_custom_call.1
$region0: #{tpu_custom_call.1}
  #allocation0 [shape = 'u32[]', space=smem, size = 0x4, offset = 0x4, fixed_abs, tag = 'smem constant byte address 0x4 - core index']
  #allocation1 [shape = 'u32[144,128]{1,0:T(1,128)}', space=vmem, size = 0x12000, scoped, tag = 'internal scratch']
  %s0 = inlined_call_operand.hbm [shape: f32[64,128], index: 0, kind: input, shape index: {}]
  %s1 = inlined_call_operand.hbm [shape: f32[64,128], index: 1, kind: output, shape index: {}]
  %s2 = sld [smem:[#allocation0]]
  $region41: #{tpu_custom_call.1} parent=0
    _
  %s4 = ssub.s32 1, %s2
  %s5 = scalar_select 0, %s4, %s2
  $region1: #{tpu_custom_call.1} parent=0
    #allocation2 [shape = 'u8[16384]{0}', space=vmem, size = 0x4000, scoped, tag = 'input window, operand 0']
    #allocation3 [shape = 's32[2]{0}', space=sflag, size = 0x8, scoped, tag = 'scoped memory for tpu_custom_call.1']
    #allocation4 [shape = 's32[2]{0}', space=sflag, size = 0x8, scoped, tag = 'scoped memory for tpu_custom_call.1']
    #allocation5 [shape = 'u8[16384]{0}', space=vmem, size = 0x4000, scoped, tag = 'output window, operand 0']
    %6 = vsyncpa [#allocation3], 0
    %s7 = scalar_lea.sflag [#allocation3], 1
    %8 = vsyncpa %s7, 0
    %9 = vsyncpa [#allocation4], 0
    %s10 = scalar_lea.sflag [#allocation4], 1
    %11 = vsyncpa %s10, 0
    loop: start=0, step=1, limit=6
    $region2: #{tpu_custom_call.1} parent=1 // loop_pre_header
      _
    $region3: #{tpu_custom_call.1} parent=1 // loop_header
      %s13 = sphi 0, %s17
      %p14 = scmp.ge.s32.totalorder %s13, 6
      %s23 = sphi 0, %s25
      %s26 = sphi 0, %s23
      %s27 = sphi 0, %s26
      %s43 = sphi 0, %s27
      %s49 = sphi 0, %s51
      %s52 = sphi 0, %s49
      %s53 = sphi 0, %s52
      %s69 = sphi 0, %s53
    $region4: #{tpu_custom_call.1} parent=1 // loop_header_branch
      %16 = sbr.rel (%p14) target = $region8
    $region5: #{tpu_custom_call.1} parent=1 // loop_body
      %s18 = ssub.s32 %s13, 1
      %s19 = ssub.s32 %s13, 2
      %s20 = sadd.s32 %s13, 1
      %s21 = ssub.s32 %s13, %s20
      %p22 = scmp.eq.s32.totalorder %s21, 0
      %s24 = sadd.s32 %s23, 1
      %s25 = scalar_select %p22, %s23, %s24
      %p28 = pneg %p22
      %p29 = scmp.eq.s32.totalorder %s13, 3
      %p30 = por %p28, %p29
      %p31 = scmp.ne.s32.totalorder %s23, %s26
      %p32 = scmp.eq.s32.totalorder %s13, 0
      %p33 = por %p31, %p32
      %p34 = scmp.ne.s32.totalorder %s23, %s26
      %p35 = scmp.eq.s32.totalorder %s18, 3
      %p36 = por %p34, %p35
      %p37 = scmp.ne.s32.totalorder %s26, %s27
      %p38 = scmp.eq.s32.totalorder %s18, 0
      %p39 = por %p37, %p38
      %p40 = scmp.ne.s32.totalorder %s26, %s27
      %p41 = scmp.eq.s32.totalorder %s19, 3
      %p42 = por %p40, %p41
      %p44 = scmp.ne.s32.totalorder %s27, %s43
      %p45 = scmp.eq.s32.totalorder %s19, 0
      %p46 = por %p44, %p45
      %s47 = ssub.s32 %s13, %s20
      %p48 = scmp.eq.s32.totalorder %s47, 0
      %s50 = sadd.s32 %s49, 1
      %s51 = scalar_select %p48, %s49, %s50
      %p54 = pneg %p48
      %p55 = scmp.eq.s32.totalorder %s13, 3
      %p56 = por %p54, %p55
      %p57 = scmp.ne.s32.totalorder %s49, %s52
      %p58 = scmp.eq.s32.totalorder %s13, 0
      %p59 = por %p57, %p58
      %p60 = scmp.ne.s32.totalorder %s49, %s52
      %p61 = scmp.eq.s32.totalorder %s18, 3
      %p62 = por %p60, %p61
      %p63 = scmp.ne.s32.totalorder %s52, %s53
      %p64 = scmp.eq.s32.totalorder %s18, 0
      %p65 = por %p63, %p64
      %p66 = scmp.ne.s32.totalorder %s52, %s53
      %p67 = scmp.eq.s32.totalorder %s19, 3
      %p68 = por %p66, %p67
      %p70 = scmp.ne.s32.totalorder %s53, %s69
      %p71 = scmp.eq.s32.totalorder %s19, 0
      %p72 = por %p70, %p71
      %p73 = scmp.le.s32.totalorder 1, %s13
      %p74 = scmp.lt.s32.totalorder %s13, 5
      %p75 = pnand %p73, %p74
      %p76 = pneg %p75
      // Predicated region
      $region9: #{tpu_custom_call.1} parent=5 // pred_check
        _
      $region10: #{tpu_custom_call.1} parent=5 // pred_check_branch
        %78 = sbr.rel (%p75) target = $region12
      $region11: #{tpu_custom_call.1} parent=5 // pred_region
        %s79 = ssub.s32 %s13, 1
      $region12: #{tpu_custom_call.1} parent=5 // pred_fallthru
        _
      %p80 = scmp.lt.s32.totalorder %s13, 4
      // Predicated region
      $region13: #{tpu_custom_call.1} parent=5 // pred_check
        %p81 = pneg %p80
      $region14: #{tpu_custom_call.1} parent=5 // pred_check_branch
        %83 = sbr.rel (%p81) target = $region16
      $region15: #{tpu_custom_call.1} parent=5 // pred_region
        // Predicated region
        $region17: #{tpu_custom_call.1} parent=15 // pred_check
          %p84 = pneg %p33
        $region18: #{tpu_custom_call.1} parent=15 // pred_check_branch
          %86 = sbr.rel (%p84) target = $region20
        $region19: #{tpu_custom_call.1} parent=15 // pred_region
          %s87 = sand.u32 %s23, 1
          %s88 = scalar_lea.sflag [#allocation3], %s87
          %s89 = sand.u32 %s23, 1
          %s90 = smul.addr %s89, 16
          %s91 = scalar_lea.vmem [#allocation2], %s90
          %s92 = smul.u32 2, %s13
          %s94 = ssub.s32 256, 256
          %95 = vsyncadd %s88, %s94
          %s96 = smul.addr %s92, 128
          %s97 = scalar_lea.hbm %s0, %s96
          %s98 = sshll.u32 %s91, 4
          %s99 = int_to_ptr.vmem [resolvable:$true] %s98
          %104 = dma.hbm_to_vmem [thread:$0]  %s97, 256, %s99, %s88, 128, 128, 8
        $region20: #{tpu_custom_call.1} parent=15 // pred_fallthru
          _
      $region16: #{tpu_custom_call.1} parent=5 // pred_fallthru
        _
      %p105 = scmp.le.s32.totalorder 1, %s13
      %p106 = scmp.lt.s32.totalorder %s13, 5
      %p107 = pnand %p105, %p106
      %p108 = pneg %p107
      // Predicated region
      $region21: #{tpu_custom_call.1} parent=5 // pred_check
        _
      $region22: #{tpu_custom_call.1} parent=5 // pred_check_branch
        %110 = sbr.rel (%p107) target = $region24
      $region23: #{tpu_custom_call.1} parent=5 // pred_region
        %s111 = ssub.s32 %s13, 1
        %s112 = sand.u32 %s26, 1
        %s113 = scalar_lea.sflag [#allocation3], %s112
        %s114 = sand.u32 %s26, 1
        %s115 = smul.addr %s114, 16
        %s116 = scalar_lea.vmem [#allocation2], %s115
        // Predicated region
        $region25: #{tpu_custom_call.1} parent=23 // pred_check
          %p117 = pneg %p39
        $region26: #{tpu_custom_call.1} parent=23 // pred_check_branch
          %119 = sbr.rel (%p117) target = $region28
        $region27: #{tpu_custom_call.1} parent=23 // pred_region
          %120 = dma.done %s113, 256
        $region28: #{tpu_custom_call.1} parent=23 // pred_fallthru
          _
        %s121 = sand.u32 %s26, 1
        %s122 = scalar_lea.sflag [#allocation3], %s121
        %s123 = sand.u32 %s26, 1
        %s124 = smul.addr %s123, 16
        %s125 = scalar_lea.vmem [#allocation2], %s124
        %p126 = pneg %p39
        %p127 = pneg %p36
        %p128 = pneg %p65
        %p129 = pneg %p62
        %s130 = sand.u32 %s52, 1
        %s131 = scalar_lea.sflag [#allocation4], %s130
        %s132 = sand.u32 %s52, 1
        %s133 = smul.addr %s132, 16
        %s134 = scalar_lea.vmem [#allocation5], %s133
        %s135 = smul.u32 2, %s18
        %s136 = smul.u32 2, %s18
        %v137 = vld [vmem:[%s116] sm:$0xff]
        %v138 = vld [vmem:[%s116 + $0x8] sm:$0xff]
        %v139 = vmul.f32 %v137, %v137
        %v140 = vmul.f32 %v138, %v138
        %141 = vadd.xlane.f32.xlu0 %v139
        %v142 = vpop.xlane.xlu0 %141
        %143 = vadd.xlane.f32.xlu0 %v140
        %v144 = vpop.xlane.xlu0 %143
        %v145 = vmax.f32 %v142, 1e-24
        %v146 = vmax.f32 %v144, 1e-24
        %v147 = vrsqrt.pop %v145
        %v148 = vrsqrt.pop %v146
        %v149 = vmul.f32 %v137, %v147
        %v150 = vmul.f32 %v138, %v148
        %151 = vst [vmem:[%s134] sm:$0xff] %v149
        %152 = vst [vmem:[%s134 + $0x8] sm:$0xff] %v150
        %s153 = sand.u32 %s52, 1
        %s154 = scalar_lea.sflag [#allocation4], %s153
        %s155 = sand.u32 %s52, 1
        %s156 = smul.addr %s155, 16
        %s157 = scalar_lea.vmem [#allocation5], %s156
        // Predicated region
        $region29: #{tpu_custom_call.1} parent=23 // pred_check
          %p158 = pneg %p62
        $region30: #{tpu_custom_call.1} parent=23 // pred_check_branch
          %160 = sbr.rel (%p158) target = $region32
        $region31: #{tpu_custom_call.1} parent=23 // pred_region
          %s161 = smul.u32 2, %s18
          %s163 = ssub.s32 256, 256
          %164 = vsyncadd %s154, %s163
          %s165 = smul.addr %s161, 128
          %s166 = scalar_lea.hbm %s1, %s165
          %s167 = sshll.u32 %s157, 4
          %s168 = int_to_ptr.vmem [resolvable:$true] %s167
          %173 = dma.vmem_to_hbm [thread:$0]  %s168, 256, %s166, %s154, 128, 128, 8
        $region32: #{tpu_custom_call.1} parent=23 // pred_fallthru
          _
      $region24: #{tpu_custom_call.1} parent=5 // pred_fallthru
        _
      %p174 = scmp.le.s32.totalorder 2, %s13
      // Predicated region
      $region33: #{tpu_custom_call.1} parent=5 // pred_check
        %p175 = pneg %p174
      $region34: #{tpu_custom_call.1} parent=5 // pred_check_branch
        %177 = sbr.rel (%p175) target = $region36
      $region35: #{tpu_custom_call.1} parent=5 // pred_region
        %s178 = ssub.s32 %s13, 2
        // Predicated region
        $region37: #{tpu_custom_call.1} parent=35 // pred_check
          %p179 = pneg %p68
        $region38: #{tpu_custom_call.1} parent=35 // pred_check_branch
          %181 = sbr.rel (%p179) target = $region40
        $region39: #{tpu_custom_call.1} parent=35 // pred_region
          %s182 = sand.u32 %s53, 1
          %s183 = scalar_lea.sflag [#allocation4], %s182
          %s184 = sand.u32 %s53, 1
          %s185 = smul.addr %s184, 16
          %s186 = scalar_lea.vmem [#allocation5], %s185
          %187 = dma.done %s183, 256
        $region40: #{tpu_custom_call.1} parent=35 // pred_fallthru
          _
      $region36: #{tpu_custom_call.1} parent=5 // pred_fallthru
        _
    $region6: #{tpu_custom_call.1} parent=1 // loop_footer
      %s17 = sadd.s32 1, %s13
    $region7: #{tpu_custom_call.1} parent=1 // loop_footer_branch
      %12 = sbr.rel target = $region3
    $region8: #{tpu_custom_call.1} parent=1 // loop_exit
      _
    %188 = vsyncpa [#allocation3], 1
    %s189 = scalar_lea.sflag [#allocation3], 1
    %190 = vsyncpa %s189, 1
    %191 = vsyncpa [#allocation4], 1
    %s192 = scalar_lea.sflag [#allocation4], 1
    %193 = vsyncpa %s192, 1

</llo_original>
